<compile_context>
chip_gen: v7x
topology: tpu7x:2x2x1
jax: 0.10.0
libtpu: 0.0.40
codegen_flags: <defaults>
</compile_context>

<pallas_src>
import functools

import jax
import jax.numpy as jnp
from jax import lax
from jax.experimental import pallas as pl
from jax.experimental.pallas import tpu as pltpu


_MXU_DTYPE = jnp.bfloat16          # MXU operand dtype (f32 accumulation everywhere)
_ACT_DTYPE = jnp.bfloat16          # intermediate activations stored in HBM
_VMEM_LIMIT = 48 * 1024 * 1024     # scoped VMEM budget: safe on v7x (64 MiB physical)
_EPS = 1e-5


def _round_up(x, m):
    return (x + m - 1) // m * m


def _vmem_resident():
    """Grid-invariant operand: whole array resident in VMEM for the call
    (single copy, no per-grid-step DMA, no double buffering)."""
    return pl.BlockSpec(memory_space=pltpu.MemorySpace.VMEM)


# ---------------------------------------------------------------------------
# kernel 1/3: conv1x1 as a tiled (tm, K) x (K, N) matmul with an optional fused
# BN+ReLU on the *input* tile and per-M-tile (sum, sum_sq) partials of the f32
# output for the consumer stage's train-mode BatchNorm.
# ---------------------------------------------------------------------------
def _conv1x1_kernel(*refs, apply_input_act, tm, m_valid, m_padded, num_m):
    if apply_input_act:
        x_ref, scale_ref, shift_ref, w_ref, y_ref, psum_ref, psq_ref = refs
        # fused BN(scale, shift) + ReLU of the producer stage (per channel, f32)
        x = jnp.maximum(x_ref[...].astype(jnp.float32) * scale_ref[...]
                        + shift_ref[...], 0.0).astype(_MXU_DTYPE)
    else:
        x_ref, w_ref, y_ref, psum_ref, psq_ref = refs
        x = x_ref[...]                                   # already bf16

    acc = jnp.dot(x, w_ref[...], preferred_element_type=jnp.float32)   # (tm, N) f32
    y_ref[...] = acc.astype(y_ref.dtype)                                # bf16 to HBM

    def _stats(vals):
        psum_ref[...] = jnp.sum(vals, axis=0, keepdims=True).reshape(psum_ref.shape)
        psq_ref[...] = jnp.sum(vals * vals, axis=0, keepdims=True).reshape(psq_ref.shape)

    if apply_input_act and m_padded != m_valid:
        # Padding rows carry relu(shift) @ w, so exclude them from the BN stats.
        # Only the last M tile contains padding -> mask only there (pl.when).
        last = pl.program_id(0) == num_m - 1

        @pl.when(jnp.logical_not(last))
        def _():
            _stats(acc)

        @pl.when(last)
        def _():
            row = pl.program_id(0) * tm + lax.broadcasted_iota(jnp.int32, (tm, 1), 0)
            _stats(acc * (row < m_valid).astype(jnp.float32))
    else:
        _stats(acc)


def conv1x1_stats(x, w, *, scale=None, shift=None, m_valid):
    """x: (M, K) bf16 rows, w: (K, N) bf16.  If scale/shift given, the producer
    stage's BN+ReLU is fused onto the input."""
    apply_input_act = scale is not None
    M, K = x.shape
    N = w.shape[1]
    tm = min(512, _round_up(M, 8))
    mp = _round_up(M, tm)
    if mp != M:
        x = jnp.pad(x, ((0, mp - M), (0, 0)))
    num_m = mp // tm

    kernel = functools.partial(_conv1x1_kernel, apply_input_act=apply_input_act,
                               tm=tm, m_valid=m_valid, m_padded=mp, num_m=num_m)

    in_specs = [pl.BlockSpec((tm, K), lambda i: (i, 0))]
    args = [x]
    if apply_input_act:
        in_specs += [_vmem_resident(), _vmem_resident()]
        args += [scale, shift]
    in_specs += [_vmem_resident()]          # (K, N) weight: resident, streamed once
    args += [w]

    return pl.pallas_call(
        kernel,
        out_shape=(jax.ShapeDtypeStruct((mp, N), _ACT_DTYPE),
                   jax.ShapeDtypeStruct((num_m, 1, N), jnp.float32),
                   jax.ShapeDtypeStruct((num_m, 1, N), jnp.float32)),
        grid=(num_m,),
        in_specs=in_specs,
        out_specs=(pl.BlockSpec((tm, N), lambda i: (i, 0)),
                   pl.BlockSpec((1, 1, N), lambda i: (i, 0, 0)),
                   pl.BlockSpec((1, 1, N), lambda i: (i, 0, 0))),
        compiler_params=pltpu.CompilerParams(
            dimension_semantics=("parallel",),
            vmem_limit_bytes=_VMEM_LIMIT),
    )(*args)


# ---------------------------------------------------------------------------
# kernel 2/3: 3x3 conv (pad=1, stride=1) over Bt images per grid step with a
# fused BN1+ReLU on the input and BN2-statistics partials on the output.
# Taps are built with pltpu.roll + boundary masks into a VMEM im2col slab and
# consumed by a single long-K matmul against the resident (9*Cin, Cout) weight.
# ---------------------------------------------------------------------------
def _conv3x3_kernel(y1_ref, scale_ref, shift_ref, w_ref,
                    y2_ref, psum_ref, psq_ref, col_ref, *, H, W):
    HW = H * W
    MB, cin = y1_ref.shape
    # fused BN1 + ReLU of the producer stage (f32 math)
    act = jnp.maximum(y1_ref[...].astype(jnp.float32) * scale_ref[...]
                      + shift_ref[...], 0.0)                            # (MB, Cin) f32
    # spatial coordinates of every row inside its own image
    p = lax.broadcasted_iota(jnp.int32, (MB, 1), 0) % HW
    hh, ww = p // W, p % W
    # (MB, 9*Cin) im2col slab: XLU rolls + VPU masks, no HBM round trip.
    # pltpu.roll follows jnp.roll semantics: out[i] = in[(i - shift) % MB],
    # so reading position p + d is roll by (-d) % MB; cross-image / wrapped rows
    # are always zeroed by the boundary mask.
    t = 0
    for dh in (-1, 0, 1):
        for dw in (-1, 0, 1):
            d = dh * W + dw
            tap = act if d == 0 else pltpu.roll(act, shift=(-d) % MB, axis=0)
            if dh or dw:
                valid = ((hh + dh >= 0) & (hh + dh < H) &
                         (ww + dw >= 0) & (ww + dw < W))
                tap = jnp.where(valid, tap, 0.0)
            col_ref[:, t * cin:(t + 1) * cin] = tap.astype(col_ref.dtype)
            t += 1
    # one long-K MXU matmul against the resident weight
    acc = jnp.dot(col_ref[...], w_ref[...], preferred_element_type=jnp.float32)
    y2_ref[...] = acc.astype(y2_ref.dtype)
    psum_ref[...] = jnp.sum(acc, axis=0, keepdims=True).reshape(psum_ref.shape)
    psq_ref[...] = jnp.sum(acc * acc, axis=0, keepdims=True).reshape(psq_ref.shape)


def conv3x3_stats(y1, scale_in, shift_in, w2, *, B, H, W, Bt):
    HW = H * W
    M = B * HW
    MB = Bt * HW
    nb = B // Bt
    cin = y1.shape[-1]
    cout = w2.shape[-1]
    # TODO(synk): for very large mid on v7x (64 MiB VMEM), add a Cout grid axis
    #             instead of keeping the full (9*Cin, Cout) weight resident.
    kernel = functools.partial(_conv3x3_kernel, H=H, W=W)
    return pl.pallas_call(
        kernel,
        out_shape=(jax.ShapeDtypeStruct((M, cout), _ACT_DTYPE),
                   jax.ShapeDtypeStruct((nb, 1, cout), jnp.float32),
                   jax.ShapeDtypeStruct((nb, 1, cout), jnp.float32)),
        grid=(nb,),
        in_specs=[pl.BlockSpec((MB, cin), lambda b: (b, 0)),
                  _vmem_resident(), _vmem_resident(), _vmem_resident()],
        out_specs=(pl.BlockSpec((MB, cout), lambda b: (b, 0)),
                   pl.BlockSpec((1, 1, cout), lambda b: (b, 0, 0)),
                   pl.BlockSpec((1, 1, cout), lambda b: (b, 0, 0))),
        scratch_shapes=[pltpu.VMEM((MB, 9 * cin), _MXU_DTYPE)],
        compiler_params=pltpu.CompilerParams(
            dimension_semantics=("parallel",),
            vmem_limit_bytes=_VMEM_LIMIT),
    )(y1, scale_in, shift_in, w2)


# ---------------------------------------------------------------------------
# kernel 3/3: fused BN3+ReLU (-> trans_feat_s) + global avg pool + reused
# teacher classifier, Bt images per grid step.
# ---------------------------------------------------------------------------
def _bn_relu_pool_cls_kernel(y3_ref, scale_ref, shift_ref, w_ref, b_ref,
                             trans_ref, pred_ref):
    C = y3_ref.shape[-1]
    scale = scale_ref[...].reshape(1, 1, C)
    shift = shift_ref[...].reshape(1, 1, C)
    h = jnp.maximum(y3_ref[...].astype(jnp.float32) * scale + shift, 0.0)  # (Bt, HW, C)
    trans_ref[...] = h
    # adaptive_avg_pool2d((1,1)) == mean over HW, then the reused classifier
    pooled = jnp.mean(h, axis=1)                                           # (Bt, C)
    logits = jnp.dot(pooled.astype(_MXU_DTYPE), w_ref[...],
                     preferred_element_type=jnp.float32) + b_ref[...]
    pred_ref[...] = logits.reshape(pred_ref.shape)


def bn_relu_pool_cls(y3, scale_in, shift_in, cls_w, cls_b, *, Bt):
    B, HW, C = y3.shape
    nb = B // Bt
    NC = cls_w.shape[1]
    return pl.pallas_call(
        _bn_relu_pool_cls_kernel,
        out_shape=(jax.ShapeDtypeStruct((B, HW, C), jnp.float32),
                   jax.ShapeDtypeStruct((nb, Bt, NC), jnp.float32)),
        grid=(nb,),
        in_specs=[pl.BlockSpec((Bt, HW, C), lambda b: (b, 0, 0)),
                  _vmem_resident(), _vmem_resident(),
                  _vmem_resident(), _vmem_resident()],
        out_specs=(pl.BlockSpec((Bt, HW, C), lambda b: (b, 0, 0)),
                   pl.BlockSpec((1, Bt, NC), lambda b: (b, 0, 0))),
        compiler_params=pltpu.CompilerParams(
            dimension_semantics=("parallel",),
            vmem_limit_bytes=_VMEM_LIMIT),
    )(y3, scale_in, shift_in, cls_w, cls_b)


# ------------------------------- glue (JAX) --------------------------------

def adaptive_avg_pool_nchw(x, out_hw):
    """F.adaptive_avg_pool2d for the integer-ratio case (covers this script)."""
    B, C, H, W = x.shape
    # TODO(synk): general adaptive pooling (non-divisible H/W ratios) not implemented.
    assert H % out_hw == 0 and W % out_hw == 0
    fh, fw = H // out_hw, W // out_hw
    return x.reshape(B, C, out_hw, fh, out_hw, fw).mean(axis=(3, 5))


def _bn_fold(psum, psq, gamma, beta, count):
    """Finalize train-mode BN from cross-tile partial sums; fold into (scale, shift)."""
    total = jnp.sum(psum, axis=0)                            # (1, C)
    total_sq = jnp.sum(psq, axis=0)                          # (1, C)
    mean = total / count
    var = jnp.maximum(total_sq / count - mean * mean, 0.0)   # biased var, as PyTorch
    scale = gamma * lax.rsqrt(var + _EPS)
    shift = beta - mean * scale
    return scale, shift


def _pick_bt(B, HW, max_rows=512):
    """Images per grid step for the 3x3 / pool stages (Bt | B, Bt*HW % 8 == 0)."""
    bt = 1
    for cand in range(1, B + 1):
        if B % cand == 0 and cand * HW <= max_rows and (cand * HW) % 8 == 0:
            bt = cand
    # TODO(synk): HW not a multiple of 8 with bt=1 needs 3-D blocking of stage 2.
    return bt


def make_params(key, s_n, t_n, factor, num_classes):
    mid = t_n // factor
    s_np, midp = _round_up(s_n, 128), _round_up(mid, 128)
    t_np, ncp = _round_up(t_n, 128), _round_up(num_classes, 128)
    ks = jax.random.split(key, 5)
    # PyTorch-layout weights, converted to matmul layout and channel-padded to 128.
    w1_pt = 0.1 * jax.random.normal(ks[0], (mid, s_n, 1, 1), jnp.float32)
    w2_pt = 0.1 * jax.random.normal(ks[1], (mid, mid, 3, 3), jnp.float32)
    w3_pt = 0.1 * jax.random.normal(ks[2], (t_n, mid, 1, 1), jnp.float32)
    cls_w_pt = 0.1 * jax.random.normal(ks[3], (num_classes, t_n), jnp.float32)
    cls_b_pt = 0.1 * jax.random.normal(ks[4], (num_classes,), jnp.float32)

    def pad2(a, rows, cols):
        return jnp.pad(a, ((0, rows - a.shape[0]), (0, cols - a.shape[1])))

    w1 = pad2(jnp.transpose(w1_pt[:, :, 0, 0], (1, 0)), s_np, midp)          # (s_np, midp)
    w2k = jnp.zeros((3, 3, midp, midp), jnp.float32)
    w2k = w2k.at[:, :, :mid, :mid].set(jnp.transpose(w2_pt, (2, 3, 1, 0)))   # (kh,kw,ci,co)
    w2 = w2k.reshape(9 * midp, midp)
    w3 = pad2(jnp.transpose(w3_pt[:, :, 0, 0], (1, 0)), midp, t_np)          # (midp, t_np)
    cls_w = pad2(jnp.transpose(cls_w_pt, (1, 0)), t_np, ncp)                 # (t_np, ncp)
    cls_b = jnp.pad(cls_b_pt, (0, ncp - num_classes)).reshape(1, ncp)

    return {
        # weights stored bf16 in HBM (halves weight DMA); matmuls accumulate in f32
        "w1": w1.astype(_MXU_DTYPE), "w2": w2.astype(_MXU_DTYPE),
        "w3": w3.astype(_MXU_DTYPE), "cls_w": cls_w.astype(_MXU_DTYPE),
        "cls_b": cls_b,
        "bn1_g": jnp.ones((1, midp), jnp.float32), "bn1_b": jnp.zeros((1, midp), jnp.float32),
        "bn2_g": jnp.ones((1, midp), jnp.float32), "bn2_b": jnp.zeros((1, midp), jnp.float32),
        "bn3_g": jnp.ones((1, t_np), jnp.float32), "bn3_b": jnp.zeros((1, t_np), jnp.float32),
        "dims": {"s_n": s_n, "mid": mid, "t_n": t_n, "num_classes": num_classes},
    }


def simkd_forward(feat_s, feat_t, params):
    """feat_s: (B, s_n, sH, sW), feat_t: (B, t_n, tH, tW), both NCHW fp32."""
    dims = params["dims"]
    t_n, num_classes = dims["t_n"], dims["num_classes"]

    s_H, t_H = feat_s.shape[2], feat_t.shape[2]
    if s_H > t_H:
        source = adaptive_avg_pool_nchw(feat_s, t_H)
        target = feat_t
    else:
        source = feat_s
        target = adaptive_avg_pool_nchw(feat_t, s_H)
    trans_feat_t = target  # NCHW, unchanged semantics

    B, s_n, H, W = source.shape
    HW = H * W
    M = B * HW
    s_np, midp = params["w1"].shape
    t_np = params["w3"].shape[1]
    ncp = params["cls_w"].shape[1]
    Bt = _pick_bt(B, HW)

    # NCHW -> flattened lane-dense NHWC rows (M, s_np) bf16 (single boundary transpose)
    x = jnp.transpose(source, (0, 2, 3, 1)).reshape(M, s_n)
    x = jnp.pad(x, ((0, 0), (0, s_np - s_n))).astype(_MXU_DTYPE)

    # stage 1: conv1x1 (s_n -> mid), BN1 stat partials fused
    y1, s1, q1 = conv1x1_stats(x, params["w1"], m_valid=M)
    scale1, shift1 = _bn_fold(s1, q1, params["bn1_g"], params["bn1_b"], M)

    # stage 2: conv3x3 (mid -> mid) with fused BN1+ReLU on the input, BN2 partials
    y2, s2, q2 = conv3x3_stats(y1, scale1, shift1, params["w2"], B=B, H=H, W=W, Bt=Bt)
    scale2, shift2 = _bn_fold(s2, q2, params["bn2_g"], params["bn2_b"], M)

    # stage 3: conv1x1 (mid -> t_n) with fused BN2+ReLU on the input, BN3 partials
    y3, s3, q3 = conv1x1_stats(y2, params["w3"], scale=scale2, shift=shift2, m_valid=M)
    scale3, shift3 = _bn_fold(s3, q3, params["bn3_g"], params["bn3_b"], M)

    # stage 4: BN3+ReLU (-> trans_feat_s) + global avg pool + reused teacher classifier
    y3 = y3[:M].reshape(B, HW, t_np)
    trans, pred = bn_relu_pool_cls(y3, scale3, shift3, params["cls_w"], params["cls_b"],
                                   Bt=Bt)

    trans_feat_s = jnp.transpose(trans[:, :, :t_n].reshape(B, H, W, t_n), (0, 3, 1, 2))
    pred_feat_s = pred.reshape(B, ncp)[:, :num_classes]
    return trans_feat_s, trans_feat_t, pred_feat_s


# --------------------------------- main ------------------------------------

if __name__ == "__main__":
    B, s_n, t_n, factor, num_classes = 2, 8, 16, 2, 10
    s_H, t_H = 8, 16  # student smaller -> teacher feature gets adaptively pooled

    key = jax.random.PRNGKey(0)
    k_p, k_s, k_t = jax.random.split(key, 3)
    params = make_params(k_p, s_n, t_n, factor, num_classes)

    feat_s = jax.random.normal(k_s, (B, s_n, s_H, s_H), jnp.float32)
    feat_t = jax.random.normal(k_t, (B, t_n, t_H, t_H), jnp.float32)

    trans_feat_s, trans_feat_t, pred_feat_s = simkd_forward(feat_s, feat_t, params)
    jax.block_until_ready((trans_feat_s, trans_feat_t, pred_feat_s))

    assert trans_feat_s.shape == (B, t_n, s_H, s_H)
    assert trans_feat_t.shape == (B, t_n, s_H, s_H)
    assert pred_feat_s.shape == (B, num_classes)
    assert bool(jnp.all(jnp.isfinite(trans_feat_s)))
    assert bool(jnp.all(jnp.isfinite(pred_feat_s)))
    print("KERNEL_OK")
</pallas_src>

<mosaic_0001>
module attributes {stable_mosaic.version = 11 : i64} {
  func.func @_conv1x1_kernel(%arg0: i32, %arg1: memref<128x128xbf16, #tpu.memory_space<vmem>>, %arg2: memref<128x128xbf16, #tpu.memory_space<vmem>>, %arg3: memref<128x128xbf16, #tpu.memory_space<vmem>>, %arg4: memref<1x1x128xf32, #tpu.memory_space<vmem>>, %arg5: memref<1x1x128xf32, #tpu.memory_space<vmem>>) attributes {dimension_semantics = [#tpu.dimension_semantics<parallel>], iteration_bounds = array<i64: 1>, scalar_prefetch = 0 : i64, scratch_operands = 0 : i64, tpu.core_type = #tpu.core_type<tc>, window_params = [{transform_indices = @transform_0, window_bounds = array<i64: 128, 128>}, {pipeline_mode = #tpu.pipeline_mode<synchronous>, transform_indices = @transform_1, window_bounds = array<i64: 128, 128>}, {transform_indices = @transform_2, window_bounds = array<i64: 128, 128>}, {transform_indices = @transform_3, window_bounds = array<i64: 1, 1, 128>}, {transform_indices = @transform_4, window_bounds = array<i64: 1, 1, 128>}]} {
    %c0 = arith.constant 0 : index
    %c0_0 = arith.constant 0 : index
    %0 = vector.load %arg1[%c0, %c0_0] : memref<128x128xbf16, #tpu.memory_space<vmem>>, vector<128x128xbf16>
    %c0_1 = arith.constant 0 : index
    %c0_2 = arith.constant 0 : index
    %1 = vector.load %arg2[%c0_1, %c0_2] : memref<128x128xbf16, #tpu.memory_space<vmem>>, vector<128x128xbf16>
    %cst = arith.constant dense<0.000000e+00> : vector<128x128xf32>
    %2 = tpu.matmul %0, %1, %cst {dimension_numbers = #tpu.dot_dimension_numbers<[1], [0], [0], [1], [0, 0, 1, 1], [], []>} : vector<128x128xbf16>, vector<128x128xbf16>, vector<128x128xf32> -> vector<128x128xf32>
    %3 = arith.truncf %2 : vector<128x128xf32> to vector<128x128xbf16>
    %c0_3 = arith.constant 0 : index
    %c0_4 = arith.constant 0 : index
    %4 = vector.load %arg3[%c0_3, %c0_4] : memref<128x128xbf16, #tpu.memory_space<vmem>>, vector<128x128xbf16>
    tpu.vector_store %arg3[%c0_3, %c0_4], %3 {strides = array<i32>} : memref<128x128xbf16, #tpu.memory_space<vmem>>, vector<128x128xbf16>,
    %cst_5 = arith.constant dense<0.000000e+00> : vector<128xf32>
    %5 = vector.multi_reduction <add>, %2, %cst_5 [0] : vector<128x128xf32> to vector<128xf32>
    %6 = vector.shape_cast %5 : vector<128xf32> to vector<1x128xf32>
    %7 = vector.shape_cast %6 : vector<1x128xf32> to vector<1x1x128xf32>
    %c0_6 = arith.constant 0 : index
    %c0_7 = arith.constant 0 : index
    %c0_8 = arith.constant 0 : index
    %8 = vector.load %arg4[%c0_6, %c0_7, %c0_8] : memref<1x1x128xf32, #tpu.memory_space<vmem>>, vector<1x1x128xf32>
    tpu.vector_store %arg4[%c0_6, %c0_7, %c0_8], %7 {strides = array<i32>} : memref<1x1x128xf32, #tpu.memory_space<vmem>>, vector<1x1x128xf32>,
    %9 = arith.mulf %2, %2 : vector<128x128xf32>
    %cst_9 = arith.constant dense<0.000000e+00> : vector<128xf32>
    %10 = vector.multi_reduction <add>, %9, %cst_9 [0] : vector<128x128xf32> to vector<128xf32>
    %11 = vector.shape_cast %10 : vector<128xf32> to vector<1x128xf32>
    %12 = vector.shape_cast %11 : vector<1x128xf32> to vector<1x1x128xf32>
    %c0_10 = arith.constant 0 : index
    %c0_11 = arith.constant 0 : index
    %c0_12 = arith.constant 0 : index
    %13 = vector.load %arg5[%c0_10, %c0_11, %c0_12] : memref<1x1x128xf32, #tpu.memory_space<vmem>>, vector<1x1x128xf32>
    tpu.vector_store %arg5[%c0_10, %c0_11, %c0_12], %12 {strides = array<i32>} : memref<1x1x128xf32, #tpu.memory_space<vmem>>, vector<1x1x128xf32>,
    return
  }
  func.func @transform_0(%arg0: i32) -> (i32, i32) {
    %c0_i32 = arith.constant 0 : i32
    %c0_i32_0 = arith.constant 0 : i32
    return %arg0, %c0_i32 : i32, i32
  }
  func.func @transform_1(%arg0: i32) -> (i32, i32) {
    %c0_i32 = arith.constant 0 : i32
    %c0_i32_0 = arith.constant 0 : i32
    %c0_i32_1 = arith.constant 0 : i32
    return %c0_i32, %c0_i32_0 : i32, i32
  }
  func.func @transform_2(%arg0: i32) -> (i32, i32) {
    %c0_i32 = arith.constant 0 : i32
    %c0_i32_0 = arith.constant 0 : i32
    return %arg0, %c0_i32 : i32, i32
  }
  func.func @transform_3(%arg0: i32) -> (i32, i32, i32) {
    %c0_i32 = arith.constant 0 : i32
    %c0_i32_0 = arith.constant 0 : i32
    %c0_i32_1 = arith.constant 0 : i32
    return %arg0, %c0_i32, %c0_i32_0 : i32, i32, i32
  }
  func.func @transform_4(%arg0: i32) -> (i32, i32, i32) {
    %c0_i32 = arith.constant 0 : i32
    %c0_i32_0 = arith.constant 0 : i32
    %c0_i32_1 = arith.constant 0 : i32
    return %arg0, %c0_i32, %c0_i32_0 : i32, i32, i32
  }
}

</mosaic_0001>

<llo_original>
// kernel: tpu_custom_call.1
$region0: #{tpu_custom_call.1}
  #allocation0 [shape = 'u32[]', space=smem, size = 0x4, offset = 0x4, fixed_abs, tag = 'smem constant byte address 0x4 - core index']
  #allocation1 [shape = 'u32[144,128]{1,0:T(1,128)}', space=vmem, size = 0x12000, scoped, tag = 'internal scratch']
  %s0 = inlined_call_operand.hbm [shape: bf16[128,128], index: 0, kind: input, shape index: {}]
  %s1 = inlined_call_operand.hbm [shape: bf16[128,128], index: 1, kind: input, shape index: {}]
  %s2 = inlined_call_operand.hbm [shape: bf16[128,128], index: 2, kind: output, shape index: {0}]
  %s3 = inlined_call_operand.hbm [shape: f32[1,1,128], index: 3, kind: output, shape index: {1}]
  %s4 = inlined_call_operand.hbm [shape: f32[1,1,128], index: 4, kind: output, shape index: {2}]
  %5 = xla_tuple %s2, %s3, %s4
  %s6 = sld [smem:[#allocation0]]
  $region42: #{tpu_custom_call.1} parent=0
    _
  %s8 = ssub.s32 1, %s6
  %s9 = scalar_select 0, %s8, %s6
  $region1: #{tpu_custom_call.1} parent=0
    #allocation2 [shape = 'u8[32768]{0}', space=vmem, size = 0x8000, scoped, tag = 'input window, operand 0, single buffered']
    #allocation3 [shape = 's32[1]{0}', space=sflag, size = 0x4, scoped, tag = 'scoped memory for tpu_custom_call.1']
    #allocation4 [shape = 's32[1]{0}', space=sflag, size = 0x4, scoped, tag = 'scoped memory for tpu_custom_call.1']
    #allocation5 [shape = 'u8[32768]{0}', space=vmem, size = 0x8000, scoped, tag = 'input window, operand 1, single buffered']
    #allocation6 [shape = 's32[1]{0}', space=sflag, size = 0x4, scoped, tag = 'scoped memory for tpu_custom_call.1']
    #allocation7 [shape = 'u8[32768]{0}', space=vmem, size = 0x8000, scoped, tag = 'output window, operand 0, single buffered']
    #allocation8 [shape = 'u8[512]{0}', space=vmem, size = 0x400, scoped, tag = 'output window, operand 1, single buffered']
    #allocation9 [shape = 's32[1]{0}', space=sflag, size = 0x4, scoped, tag = 'scoped memory for tpu_custom_call.1']
    #allocation10 [shape = 'u8[512]{0}', space=vmem, size = 0x400, scoped, tag = 'output window, operand 2, single buffered']
    %10 = vsyncpa [#allocation3], 0
    %11 = vsyncpa [#allocation6], 0
    %12 = vsyncpa [#allocation4], 0
    %13 = vsyncpa [#allocation9], 0
    // Predicated region
    $region2: #{tpu_custom_call.1} parent=1 // pred_check
      _
    $region3: #{tpu_custom_call.1} parent=1 // pred_check_branch
      %15 = sbr.rel (0) target = $region5
    $region4: #{tpu_custom_call.1} parent=1 // pred_region
      %s17 = ssub.s32 1024, 1024
      %18 = vsyncadd [#allocation3], %s17
      %s19 = sshll.u32 [#allocation2], 4
      %s20 = int_to_ptr.vmem [resolvable:$true] %s19
      %25 = dma.hbm_to_vmem [thread:$0]  %s0, 1024, %s20, [#allocation3], 64, 64, 4
    $region5: #{tpu_custom_call.1} parent=1 // pred_fallthru
      _
    // Predicated region
    $region6: #{tpu_custom_call.1} parent=1 // pred_check
      _
    $region7: #{tpu_custom_call.1} parent=1 // pred_check_branch
      %27 = sbr.rel (0) target = $region9
    $region8: #{tpu_custom_call.1} parent=1 // pred_region
      %s29 = ssub.s32 1024, 1024
      %30 = vsyncadd [#allocation6], %s29
      %s31 = sshll.u32 [#allocation5], 4
      %s32 = int_to_ptr.vmem [resolvable:$true] %s31
      %37 = dma.hbm_to_vmem [thread:$0]  %s1, 1024, %s32, [#allocation6], 64, 64, 4
    $region9: #{tpu_custom_call.1} parent=1 // pred_fallthru
      _
    // Predicated region
    $region10: #{tpu_custom_call.1} parent=1 // pred_check
      _
    $region11: #{tpu_custom_call.1} parent=1 // pred_check_branch
      %39 = sbr.rel (0) target = $region13
    $region12: #{tpu_custom_call.1} parent=1 // pred_region
      %40 = dma.done [#allocation3], 1024
    $region13: #{tpu_custom_call.1} parent=1 // pred_fallthru
      _
    // Predicated region
    $region14: #{tpu_custom_call.1} parent=1 // pred_check
      _
    $region15: #{tpu_custom_call.1} parent=1 // pred_check_branch
      %42 = sbr.rel (0) target = $region17
    $region16: #{tpu_custom_call.1} parent=1 // pred_region
      %43 = dma.done [#allocation6], 1024
    $region17: #{tpu_custom_call.1} parent=1 // pred_fallthru
      _
    %v45 = vld [vmem:[#allocation2] sm:$0xf]
    %v46 = vld [vmem:[#allocation2 + $0x4] sm:$0xf]
    %v47 = vld [vmem:[#allocation2 + $0x8] sm:$0xf]
    %v48 = vld [vmem:[#allocation2 + $0xc] sm:$0xf]
    %v49 = vld [vmem:[#allocation2 + $0x10] sm:$0xf]
    %v50 = vld [vmem:[#allocation2 + $0x14] sm:$0xf]
    %v51 = vld [vmem:[#allocation2 + $0x18] sm:$0xf]
    %v52 = vld [vmem:[#allocation2 + $0x1c] sm:$0xf]
    %v53 = vld [vmem:[#allocation2 + $0x20] sm:$0xf]
    %v54 = vld [vmem:[#allocation2 + $0x24] sm:$0xf]
    %v55 = vld [vmem:[#allocation2 + $0x28] sm:$0xf]
    %v56 = vld [vmem:[#allocation2 + $0x2c] sm:$0xf]
    %v57 = vld [vmem:[#allocation2 + $0x30] sm:$0xf]
    %v58 = vld [vmem:[#allocation2 + $0x34] sm:$0xf]
    %v59 = vld [vmem:[#allocation2 + $0x38] sm:$0xf]
    %v60 = vld [vmem:[#allocation2 + $0x3c] sm:$0xf]
    %v61 = vld [vmem:[#allocation5] sm:$0xf]
    %v62 = vld [vmem:[#allocation5 + $0x4] sm:$0xf]
    %v63 = vld [vmem:[#allocation5 + $0x8] sm:$0xf]
    %v64 = vld [vmem:[#allocation5 + $0xc] sm:$0xf]
    %v65 = vld [vmem:[#allocation5 + $0x10] sm:$0xf]
    %v66 = vld [vmem:[#allocation5 + $0x14] sm:$0xf]
    %v67 = vld [vmem:[#allocation5 + $0x18] sm:$0xf]
    %v68 = vld [vmem:[#allocation5 + $0x1c] sm:$0xf]
    %v69 = vld [vmem:[#allocation5 + $0x20] sm:$0xf]
    %v70 = vld [vmem:[#allocation5 + $0x24] sm:$0xf]
    %v71 = vld [vmem:[#allocation5 + $0x28] sm:$0xf]
    %v72 = vld [vmem:[#allocation5 + $0x2c] sm:$0xf]
    %v73 = vld [vmem:[#allocation5 + $0x30] sm:$0xf]
    %v74 = vld [vmem:[#allocation5 + $0x34] sm:$0xf]
    %v75 = vld [vmem:[#allocation5 + $0x38] sm:$0xf]
    %v76 = vld [vmem:[#allocation5 + $0x3c] sm:$0xf]
    %v93 = vunpack.c.l.b16 %v45
    %v94 = vunpack.c.l.b16 %v46
    %v95 = vunpack.c.l.b16 %v47
    %v96 = vunpack.c.l.b16 %v48
    %v97 = vunpack.c.l.b16 %v49
    %v98 = vunpack.c.l.b16 %v50
    %v99 = vunpack.c.l.b16 %v51
    %v100 = vunpack.c.l.b16 %v52
    %v101 = vunpack.c.l.b16 %v53
    %v102 = vunpack.c.l.b16 %v54
    %v103 = vunpack.c.l.b16 %v55
    %v104 = vunpack.c.l.b16 %v56
    %v105 = vunpack.c.l.b16 %v57
    %v106 = vunpack.c.l.b16 %v58
    %v107 = vunpack.c.l.b16 %v59
    %v108 = vunpack.c.l.b16 %v60
    %v109 = vpack.c.b16 %v94, %v93
    %v110 = vpack.c.b16 %v96, %v95
    %v111 = vpack.c.b16 %v98, %v97
    %v112 = vpack.c.b16 %v100, %v99
    %v113 = vpack.c.b16 %v102, %v101
    %v114 = vpack.c.b16 %v104, %v103
    %v115 = vpack.c.b16 %v106, %v105
    %v116 = vpack.c.b16 %v108, %v107
    %v141 = vunpack.c.l.b16 %v61
    %v142 = vunpack.c.l.b16 %v62
    %v143 = vunpack.c.l.b16 %v63
    %v144 = vunpack.c.l.b16 %v64
    %v145 = vunpack.c.l.b16 %v65
    %v146 = vunpack.c.l.b16 %v66
    %v147 = vunpack.c.l.b16 %v67
    %v148 = vunpack.c.l.b16 %v68
    %v149 = vunpack.c.l.b16 %v69
    %v150 = vunpack.c.l.b16 %v70
    %v151 = vunpack.c.l.b16 %v71
    %v152 = vunpack.c.l.b16 %v72
    %v153 = vunpack.c.l.b16 %v73
    %v154 = vunpack.c.l.b16 %v74
    %v155 = vunpack.c.l.b16 %v75
    %v156 = vunpack.c.l.b16 %v76
    %v157 = vpack.c.b16 %v142, %v141
    %v158 = vpack.c.b16 %v144, %v143
    %v159 = vpack.c.b16 %v146, %v145
    %v160 = vpack.c.b16 %v148, %v147
    %v161 = vpack.c.b16 %v150, %v149
    %v162 = vpack.c.b16 %v152, %v151
    %v163 = vpack.c.b16 %v154, %v153
    %v164 = vpack.c.b16 %v156, %v155
    %173 = vmatprep.subr.bf16.mxu0 0
    %174 = vmatpush1.bf16.msra.mxu0 %v157
    %175 = vmatprep.subr.bf16.mxu0 0
    %176 = vmatpush1.bf16.msra.mxu0 %v158
    %177 = vmatprep.subr.bf16.mxu0 0
    %178 = vmatpush1.bf16.msra.mxu0 %v159
    %179 = vmatprep.subr.bf16.mxu0 0
    %180 = vmatpush1.bf16.msra.mxu0 %v160
    %181 = vmatprep.subr.bf16.mxu0 0
    %182 = vmatpush1.bf16.msra.mxu0 %v161
    %183 = vmatprep.subr.bf16.mxu0 0
    %184 = vmatpush1.bf16.msra.mxu0 %v162
    %185 = vmatprep.subr.bf16.mxu0 0
    %186 = vmatpush1.bf16.msra.mxu0 %v163
    %187 = vmatprep.subr.bf16.mxu0 0
    %188 = vmatpush1.bf16.msra.mxu0 %v164
    %189 = vmatprep.subr.bf16.mxu0 0
    %190 = vmatpush1.bf16.msra.mxu0 0
    %191 = vmatprep.subr.bf16.mxu0 0
    %192 = vmatpush1.bf16.msra.mxu0 0
    %193 = vmatprep.subr.bf16.mxu0 0
    %194 = vmatpush1.bf16.msra.mxu0 0
    %195 = vmatprep.subr.bf16.mxu0 0
    %196 = vmatpush1.bf16.msra.mxu0 0
    %197 = vmatprep.subr.bf16.mxu0 0
    %198 = vmatpush1.bf16.msra.mxu0 0
    %199 = vmatprep.subr.bf16.mxu0 0
    %200 = vmatpush1.bf16.msra.mxu0 0
    %201 = vmatprep.subr.bf16.mxu0 0
    %202 = vmatpush1.bf16.msra.mxu0 0
    %203 = vmatprep.subr.bf16.mxu0 0
    %204 = vmatpush1.bf16.msra.mxu0 0
    %205 = vmatprep.mubr.bf16.mxu0 0
    %206 = vmatmul.mubr.bf16.gmra.mrb[0].mxu0 %v109
    %v207 = vpop.f32.mrb[0].mxu0
    %v208 = vadd.f32 0.0, %v207
    %v209 = vpop.f32.mrb[0].mxu0
    %v210 = vpop.f32.mrb[0].mxu0
    %v211 = vadd.f32 0.0, %v210
    %v212 = vpop.f32.mrb[0].mxu0
    %213 = vmatprep.mubr.bf16.mxu0 0
    %214 = vmatmul.mubr.bf16.gmra.mrb[0].mxu0 %v110
    %v215 = vpop.f32.mrb[0].mxu0
    %v216 = vadd.f32 0.0, %v215
    %v217 = vpop.f32.mrb[0].mxu0
    %v218 = vpop.f32.mrb[0].mxu0
    %v219 = vadd.f32 0.0, %v218
    %v220 = vpop.f32.mrb[0].mxu0
    %221 = vmatprep.mubr.bf16.mxu0 0
    %222 = vmatmul.mubr.bf16.gmra.mrb[0].mxu0 %v111
    %v223 = vpop.f32.mrb[0].mxu0
    %v224 = vadd.f32 0.0, %v223
    %v225 = vpop.f32.mrb[0].mxu0
    %v226 = vpop.f32.mrb[0].mxu0
    %v227 = vadd.f32 0.0, %v226
    %v228 = vpop.f32.mrb[0].mxu0
    %229 = vmatprep.mubr.bf16.mxu0 0
    %230 = vmatmul.mubr.bf16.gmra.mrb[0].mxu0 %v112
    %v231 = vpop.f32.mrb[0].mxu0
    %v232 = vadd.f32 0.0, %v231
    %v233 = vpop.f32.mrb[0].mxu0
    %v234 = vpop.f32.mrb[0].mxu0
    %v235 = vadd.f32 0.0, %v234
    %v236 = vpop.f32.mrb[0].mxu0
    %237 = vmatprep.mubr.bf16.mxu0 0
    %238 = vmatmul.mubr.bf16.gmra.mrb[0].mxu0 %v113
    %v239 = vpop.f32.mrb[0].mxu0
    %v240 = vadd.f32 0.0, %v239
    %v241 = vpop.f32.mrb[0].mxu0
    %v242 = vpop.f32.mrb[0].mxu0
    %v243 = vadd.f32 0.0, %v242
    %v244 = vpop.f32.mrb[0].mxu0
    %245 = vmatprep.mubr.bf16.mxu0 0
    %246 = vmatmul.mubr.bf16.gmra.mrb[0].mxu0 %v114
    %v247 = vpop.f32.mrb[0].mxu0
    %v248 = vadd.f32 0.0, %v247
    %v249 = vpop.f32.mrb[0].mxu0
    %v250 = vpop.f32.mrb[0].mxu0
    %v251 = vadd.f32 0.0, %v250
    %v252 = vpop.f32.mrb[0].mxu0
    %253 = vmatprep.mubr.bf16.mxu0 0
    %254 = vmatmul.mubr.bf16.gmra.mrb[0].mxu0 %v115
    %v255 = vpop.f32.mrb[0].mxu0
    %v256 = vadd.f32 0.0, %v255
    %v257 = vpop.f32.mrb[0].mxu0
    %v258 = vpop.f32.mrb[0].mxu0
    %v259 = vadd.f32 0.0, %v258
    %v260 = vpop.f32.mrb[0].mxu0
    %261 = vmatprep.mubr.bf16.mxu0 0
    %262 = vmatmul.mubr.bf16.gmra.mrb[0].mxu0 %v116
    %v263 = vpop.f32.mrb[0].mxu0
    %v264 = vadd.f32 0.0, %v263
    %v265 = vpop.f32.mrb[0].mxu0
    %v266 = vpop.f32.mrb[0].mxu0
    %v267 = vadd.f32 0.0, %v266
    %v268 = vpop.f32.mrb[0].mxu0
    %269 = vdwg.mxu0
    %v270 = vpack.c.bf16 %v211, %v208
    %v271 = vpack.c.bf16 %v219, %v216
    %v272 = vpack.c.bf16 %v227, %v224
    %v273 = vpack.c.bf16 %v235, %v232
    %v274 = vpack.c.bf16 %v243, %v240
    %v275 = vpack.c.bf16 %v251, %v248
    %v276 = vpack.c.bf16 %v259, %v256
    %v277 = vpack.c.bf16 %v267, %v264
    %v286 = vunpack.c.l.b16 %v270
    %v287 = vunpack.c.h.b16 %v270
    %v288 = vunpack.c.l.b16 %v271
    %v289 = vunpack.c.h.b16 %v271
    %v290 = vunpack.c.l.b16 %v272
    %v291 = vunpack.c.h.b16 %v272
    %v292 = vunpack.c.l.b16 %v273
    %v293 = vunpack.c.h.b16 %v273
    %v294 = vunpack.c.l.b16 %v274
    %v295 = vunpack.c.h.b16 %v274
    %v296 = vunpack.c.l.b16 %v275
    %v297 = vunpack.c.h.b16 %v275
    %v298 = vunpack.c.l.b16 %v276
    %v299 = vunpack.c.h.b16 %v276
    %v300 = vunpack.c.l.b16 %v277
    %v301 = vunpack.c.h.b16 %v277
    %v302 = vpack.c.b16 %v286, %v286
    %v303 = vpack.c.b16 %v287, %v287
    %v304 = vpack.c.b16 %v288, %v288
    %v305 = vpack.c.b16 %v289, %v289
    %v306 = vpack.c.b16 %v290, %v290
    %v307 = vpack.c.b16 %v291, %v291
    %v308 = vpack.c.b16 %v292, %v292
    %v309 = vpack.c.b16 %v293, %v293
    %v310 = vpack.c.b16 %v294, %v294
    %v311 = vpack.c.b16 %v295, %v295
    %v312 = vpack.c.b16 %v296, %v296
    %v313 = vpack.c.b16 %v297, %v297
    %v314 = vpack.c.b16 %v298, %v298
    %v315 = vpack.c.b16 %v299, %v299
    %v316 = vpack.c.b16 %v300, %v300
    %v317 = vpack.c.b16 %v301, %v301
    %334 = vst [vmem:[#allocation7] sm:$0xf] %v302
    %335 = vst [vmem:[#allocation7 + $0x4] sm:$0xf] %v303
    %336 = vst [vmem:[#allocation7 + $0x8] sm:$0xf] %v304
    %337 = vst [vmem:[#allocation7 + $0xc] sm:$0xf] %v305
    %338 = vst [vmem:[#allocation7 + $0x10] sm:$0xf] %v306
    %339 = vst [vmem:[#allocation7 + $0x14] sm:$0xf] %v307
    %340 = vst [vmem:[#allocation7 + $0x18] sm:$0xf] %v308
    %341 = vst [vmem:[#allocation7 + $0x1c] sm:$0xf] %v309
    %342 = vst [vmem:[#allocation7 + $0x20] sm:$0xf] %v310
    %343 = vst [vmem:[#allocation7 + $0x24] sm:$0xf] %v311
    %344 = vst [vmem:[#allocation7 + $0x28] sm:$0xf] %v312
    %345 = vst [vmem:[#allocation7 + $0x2c] sm:$0xf] %v313
    %346 = vst [vmem:[#allocation7 + $0x30] sm:$0xf] %v314
    %347 = vst [vmem:[#allocation7 + $0x34] sm:$0xf] %v315
    %348 = vst [vmem:[#allocation7 + $0x38] sm:$0xf] %v316
    %349 = vst [vmem:[#allocation7 + $0x3c] sm:$0xf] %v317
    %v350 = vadd.f32 %v208, %v211
    %v351 = vadd.f32 %v350, %v216
    %v352 = vadd.f32 %v351, %v219
    %v353 = vadd.f32 %v352, %v224
    %v354 = vadd.f32 %v353, %v227
    %v355 = vadd.f32 %v354, %v232
    %v356 = vadd.f32 %v355, %v235
    %v357 = vadd.f32 %v356, %v240
    %v358 = vadd.f32 %v357, %v243
    %v359 = vadd.f32 %v358, %v248
    %v360 = vadd.f32 %v359, %v251
    %v361 = vadd.f32 %v360, %v256
    %v362 = vadd.f32 %v361, %v259
    %v363 = vadd.f32 %v362, %v264
    %v364 = vadd.f32 %v363, %v267
    %v365 = vrot.slane %v364, 4
    %v366 = vadd.f32 %v364, %v365
    %v367 = vrot.slane %v366, 2
    %v368 = vadd.f32 %v366, %v367
    %v369 = vrot.slane %v368, 1
    %v370 = vadd.f32 %v368, %v369
    %371 = vst [vmem:[#allocation8] sm:$0x1] %v370
    %v372 = vmul.f32 %v208, %v208
    %v373 = vmul.f32 %v211, %v211
    %v374 = vmul.f32 %v216, %v216
    %v375 = vmul.f32 %v219, %v219
    %v376 = vmul.f32 %v224, %v224
    %v377 = vmul.f32 %v227, %v227
    %v378 = vmul.f32 %v232, %v232
    %v379 = vmul.f32 %v235, %v235
    %v380 = vmul.f32 %v240, %v240
    %v381 = vmul.f32 %v243, %v243
    %v382 = vmul.f32 %v248, %v248
    %v383 = vmul.f32 %v251, %v251
    %v384 = vmul.f32 %v256, %v256
    %v385 = vmul.f32 %v259, %v259
    %v386 = vmul.f32 %v264, %v264
    %v387 = vmul.f32 %v267, %v267
    %v388 = vadd.f32 %v372, %v373
    %v389 = vadd.f32 %v388, %v374
    %v390 = vadd.f32 %v389, %v375
    %v391 = vadd.f32 %v390, %v376
    %v392 = vadd.f32 %v391, %v377
    %v393 = vadd.f32 %v392, %v378
    %v394 = vadd.f32 %v393, %v379
    %v395 = vadd.f32 %v394, %v380
    %v396 = vadd.f32 %v395, %v381
    %v397 = vadd.f32 %v396, %v382
    %v398 = vadd.f32 %v397, %v383
    %v399 = vadd.f32 %v398, %v384
    %v400 = vadd.f32 %v399, %v385
    %v401 = vadd.f32 %v400, %v386
    %v402 = vadd.f32 %v401, %v387
    %v403 = vrot.slane %v402, 4
    %v404 = vadd.f32 %v402, %v403
    %v405 = vrot.slane %v404, 2
    %v406 = vadd.f32 %v404, %v405
    %v407 = vrot.slane %v406, 1
    %v408 = vadd.f32 %v406, %v407
    %409 = vst [vmem:[#allocation10] sm:$0x1] %v408
    // Predicated region
    $region18: #{tpu_custom_call.1} parent=1 // pred_check
      _
    $region19: #{tpu_custom_call.1} parent=1 // pred_check_branch
      %411 = sbr.rel (0) target = $region21
    $region20: #{tpu_custom_call.1} parent=1 // pred_region
      %s413 = ssub.s32 1024, 1024
      %414 = vsyncadd [#allocation4], %s413
      %s415 = sshll.u32 [#allocation7], 4
      %s416 = int_to_ptr.vmem [resolvable:$true] %s415
      %421 = dma.vmem_to_hbm [thread:$0]  %s416, 1024, %s2, [#allocation4], 64, 64, 4
    $region21: #{tpu_custom_call.1} parent=1 // pred_fallthru
      _
    // Predicated region
    $region22: #{tpu_custom_call.1} parent=1 // pred_check
      _
    $region23: #{tpu_custom_call.1} parent=1 // pred_check_branch
      %423 = sbr.rel (0) target = $region25
    $region24: #{tpu_custom_call.1} parent=1 // pred_region
      %s425 = ssub.s32 16, 16
      %426 = vsyncadd [#allocation9], %s425
      %s428 = sshll.u32 [#allocation8], 4
      %s429 = int_to_ptr.vmem [resolvable:$true] %s428
      %431 = dma.vmem_to_hbm [thread:$0]  %s429, 16, %s3, [#allocation9]
    $region25: #{tpu_custom_call.1} parent=1 // pred_fallthru
      _
    // Predicated region
    $region26: #{tpu_custom_call.1} parent=1 // pred_check
      _
    $region27: #{tpu_custom_call.1} parent=1 // pred_check_branch
      %433 = sbr.rel (0) target = $region29
    $region28: #{tpu_custom_call.1} parent=1 // pred_region
      %s435 = ssub.s32 16, 16
      %436 = vsyncadd [#allocation9], %s435
      %s438 = sshll.u32 [#allocation10], 4
      %s439 = int_to_ptr.vmem [resolvable:$true] %s438
      %441 = dma.vmem_to_hbm [thread:$0]  %s439, 16, %s4, [#allocation9]
    $region29: #{tpu_custom_call.1} parent=1 // pred_fallthru
      _
    // Predicated region
    $region30: #{tpu_custom_call.1} parent=1 // pred_check
      _
    $region31: #{tpu_custom_call.1} parent=1 // pred_check_branch
      %443 = sbr.rel (0) target = $region33
    $region32: #{tpu_custom_call.1} parent=1 // pred_region
      %444 = dma.done [#allocation4], 1024
    $region33: #{tpu_custom_call.1} parent=1 // pred_fallthru
      _
    // Predicated region
    $region34: #{tpu_custom_call.1} parent=1 // pred_check
      _
    $region35: #{tpu_custom_call.1} parent=1 // pred_check_branch
      %446 = sbr.rel (0) target = $region37
    $region36: #{tpu_custom_call.1} parent=1 // pred_region
      %447 = dma.done [#allocation9], 16
    $region37: #{tpu_custom_call.1} parent=1 // pred_fallthru
      _
    // Predicated region
    $region38: #{tpu_custom_call.1} parent=1 // pred_check
      _
    $region39: #{tpu_custom_call.1} parent=1 // pred_check_branch
      %449 = sbr.rel (0) target = $region41
    $region40: #{tpu_custom_call.1} parent=1 // pred_region
      %450 = dma.done [#allocation9], 16
    $region41: #{tpu_custom_call.1} parent=1 // pred_fallthru
      _
    %451 = vsyncpa [#allocation3], 1
    %452 = vsyncpa [#allocation6], 1
    %453 = vsyncpa [#allocation4], 1
    %454 = vsyncpa [#allocation9], 1

</llo_original>
